<compile_context>
chip_gen: v7x
topology: tpu7x:2x2x1
jax: 0.10.0
libtpu: 0.0.40
codegen_flags: <defaults>
</compile_context>

<pallas_src>
import jax
import jax.numpy as jnp
from jax import lax
from jax.experimental import pallas as pl
from jax.experimental.pallas import tpu as pltpu


def aux_head2_kernel(x_ref, w1_ref, b1_ref, w2_ref, b2_ref, out_ref):
    # Layer 1: (TB, in_ch) x (hidden, in_ch) contracted on dim 1 of both
    # operands -> (TB, hidden).  MXU handles the transposed-B contraction
    # natively, so no weight transpose is needed anywhere.
    h = lax.dot_general(
        x_ref[...], w1_ref[...],
        dimension_numbers=(((1,), (1,)), ((), ())),
        preferred_element_type=jnp.float32) + b1_ref[...]
    h = jnp.maximum(h, 0.0)                      # ReLU (VPU)

    # Layer 2: (TB, hidden) x (num_aux, hidden) -> (TB, num_aux)
    logits = lax.dot_general(
        h, w2_ref[...],
        dimension_numbers=(((1,), (1,)), ((), ())),
        preferred_element_type=jnp.float32) + b2_ref[...]

    # Numerically stable softmax over num_aux (last axis).
    m = jnp.max(logits, axis=-1, keepdims=True)
    e = jnp.exp(logits - m)
    denom = jnp.sum(e, axis=-1, keepdims=True)
    p = e * pl.reciprocal(denom, approx=True)    # EUP slot, ~free

    # Single fused writeback: [logits | probs] -> (TB, 2*num_aux).
    out_ref[...] = jnp.concatenate([logits, p], axis=-1).astype(out_ref.dtype)


def auxiliary_head2(x_aux, w1, b1, w2, b2, *, max_tile_rows=512):
    """x_aux: (B, in_ch); w1: (hidden, in_ch); b1: (hidden,);
       w2: (num_aux, hidden); b2: (num_aux,).  Returns (logits, softmax)."""
    B, in_ch = x_aux.shape
    hidden = w1.shape[0]
    num_aux = w2.shape[0]

    # Batch tile: full batch if small, otherwise 512-row tiles (multiple of 8,
    # comfortably inside v7x's 64 MiB VMEM even for in_ch=1536 f32).
    TB = B if B <= max_tile_rows else max_tile_rows
    grid = (pl.cdiv(B, TB),)

    # Keep biases 2-D for TPU layout.
    b1_2d = b1.reshape(1, hidden)
    b2_2d = b2.reshape(1, num_aux)

    cost = pl.CostEstimate(
        flops=2 * B * in_ch * hidden + 2 * B * hidden * num_aux,
        transcendentals=B * num_aux,
        bytes_accessed=4 * (B * in_ch + hidden * in_ch + hidden
                            + num_aux * hidden + num_aux + 2 * B * num_aux),
    )

    fused = pl.pallas_call(
        aux_head2_kernel,
        grid=grid,
        in_specs=[
            pl.BlockSpec((TB, in_ch), lambda i: (i, 0)),       # x: tiled on batch
            pl.BlockSpec((hidden, in_ch), lambda i: (0, 0)),   # w1: resident
            pl.BlockSpec((1, hidden), lambda i: (0, 0)),       # b1: resident
            pl.BlockSpec((num_aux, hidden), lambda i: (0, 0)), # w2: resident
            pl.BlockSpec((1, num_aux), lambda i: (0, 0)),      # b2: resident
        ],
        out_specs=pl.BlockSpec((TB, 2 * num_aux), lambda i: (i, 0)),
        out_shape=jax.ShapeDtypeStruct((B, 2 * num_aux), jnp.float32),
        compiler_params=pltpu.CompilerParams(
            dimension_semantics=("parallel",)),
        cost_estimate=cost,
    )(x_aux, w1, b1_2d, w2, b2_2d)

    y = fused[:, :num_aux]
    p = fused[:, num_aux:]

    # torch .squeeze(): drop all size-1 dims (no-op for B>1, num_aux>1).
    y = jnp.squeeze(y)
    p = jnp.squeeze(p)
    return y, p


if __name__ == "__main__":
    # Shapes consistent with the module: in_ch=1536 (module default),
    # hidden=128 (fixed by the module), small batch and num_aux.
    B, in_ch, hidden, num_aux = 8, 1536, 128, 16

    key = jax.random.PRNGKey(0)
    kx, kw1, kb1, kw2, kb2 = jax.random.split(key, 5)

    x_aux = jax.random.normal(kx, (B, in_ch), dtype=jnp.float32)

    # Deterministic synthetic nn.Linear parameters (PyTorch (out, in) layout).
    bound1 = 1.0 / (in_ch ** 0.5)
    w1 = jax.random.uniform(kw1, (hidden, in_ch), jnp.float32, -bound1, bound1)
    b1 = jax.random.uniform(kb1, (hidden,), jnp.float32, -bound1, bound1)
    bound2 = 1.0 / (hidden ** 0.5)
    w2 = jax.random.uniform(kw2, (num_aux, hidden), jnp.float32, -bound2, bound2)
    b2 = jax.random.uniform(kb2, (num_aux,), jnp.float32, -bound2, bound2)

    y, p = auxiliary_head2(x_aux, w1, b1, w2, b2)
    jax.block_until_ready((y, p))

    # Plain-JAX reference of the torch forward.
    h_ref = jnp.maximum(x_aux @ w1.T + b1, 0.0)
    y_ref = h_ref @ w2.T + b2
    p_ref = jax.nn.softmax(y_ref, axis=1)

    assert jnp.allclose(y, y_ref, atol=1e-4, rtol=1e-4)
    # Looser tolerance because of pl.reciprocal(approx=True) in the softmax.
    assert jnp.allclose(p, p_ref, atol=1e-3, rtol=3e-3)

    print("KERNEL_OK")
</pallas_src>

<mosaic_0001>
module attributes {stable_mosaic.version = 11 : i64} {
  func.func @aux_head2_kernel(%arg0: i32, %arg1: memref<8x1536xf32, #tpu.memory_space<vmem>>, %arg2: memref<128x1536xf32, #tpu.memory_space<vmem>>, %arg3: memref<1x128xf32, #tpu.memory_space<vmem>>, %arg4: memref<16x128xf32, #tpu.memory_space<vmem>>, %arg5: memref<1x16xf32, #tpu.memory_space<vmem>>, %arg6: memref<8x32xf32, #tpu.memory_space<vmem>>) attributes {dimension_semantics = [#tpu.dimension_semantics<parallel>], iteration_bounds = array<i64: 1>, scalar_prefetch = 0 : i64, scratch_operands = 0 : i64, tpu.core_type = #tpu.core_type<tc>, window_params = [{transform_indices = @transform_0, window_bounds = array<i64: 8, 1536>}, {pipeline_mode = #tpu.pipeline_mode<synchronous>, transform_indices = @transform_1, window_bounds = array<i64: 128, 1536>}, {pipeline_mode = #tpu.pipeline_mode<synchronous>, transform_indices = @transform_2, window_bounds = array<i64: 1, 128>}, {pipeline_mode = #tpu.pipeline_mode<synchronous>, transform_indices = @transform_3, window_bounds = array<i64: 16, 128>}, {pipeline_mode = #tpu.pipeline_mode<synchronous>, transform_indices = @transform_4, window_bounds = array<i64: 1, 16>}, {transform_indices = @transform_5, window_bounds = array<i64: 8, 32>}]} {
    %c0 = arith.constant 0 : index
    %c0_0 = arith.constant 0 : index
    %0 = vector.load %arg1[%c0, %c0_0] : memref<8x1536xf32, #tpu.memory_space<vmem>>, vector<8x1536xf32>
    %c0_1 = arith.constant 0 : index
    %c0_2 = arith.constant 0 : index
    %1 = vector.load %arg2[%c0_1, %c0_2] : memref<128x1536xf32, #tpu.memory_space<vmem>>, vector<128x1536xf32>
    %cst = arith.constant dense<0.000000e+00> : vector<8x128xf32>
    %2 = tpu.matmul %0, %1, %cst {dimension_numbers = #tpu.dot_dimension_numbers<[1], [1], [0], [0], [0, 0, 1, 0], [], []>} : vector<8x1536xf32>, vector<128x1536xf32>, vector<8x128xf32> -> vector<8x128xf32>
    %c0_3 = arith.constant 0 : index
    %c0_4 = arith.constant 0 : index
    %3 = vector.load %arg3[%c0_3, %c0_4] : memref<1x128xf32, #tpu.memory_space<vmem>>, vector<1x128xf32>
    %4 = vector.broadcast %3 : vector<1x128xf32> to vector<8x128xf32>
    %5 = arith.addf %2, %4 : vector<8x128xf32>
    %cst_5 = arith.constant 0.000000e+00 : f32
    %6 = vector.broadcast %cst_5 : f32 to vector<8x128xf32>
    %7 = arith.maximumf %5, %6 : vector<8x128xf32>
    %c0_6 = arith.constant 0 : index
    %c0_7 = arith.constant 0 : index
    %8 = vector.load %arg4[%c0_6, %c0_7] : memref<16x128xf32, #tpu.memory_space<vmem>>, vector<16x128xf32>
    %cst_8 = arith.constant dense<0.000000e+00> : vector<8x16xf32>
    %9 = tpu.matmul %7, %8, %cst_8 {dimension_numbers = #tpu.dot_dimension_numbers<[1], [1], [0], [0], [0, 0, 1, 0], [], []>} : vector<8x128xf32>, vector<16x128xf32>, vector<8x16xf32> -> vector<8x16xf32>
    %c0_9 = arith.constant 0 : index
    %c0_10 = arith.constant 0 : index
    %10 = vector.load %arg5[%c0_9, %c0_10] : memref<1x16xf32, #tpu.memory_space<vmem>>, vector<1x16xf32>
    %11 = vector.broadcast %10 : vector<1x16xf32> to vector<8x16xf32>
    %12 = arith.addf %9, %11 : vector<8x16xf32>
    %cst_11 = arith.constant dense<0xFF800000> : vector<8xf32>
    %13 = vector.multi_reduction <maximumf>, %12, %cst_11 [1] : vector<8x16xf32> to vector<8xf32>
    %14 = vector.shape_cast %13 : vector<8xf32> to vector<8x1xf32>
    %15 = vector.broadcast %14 : vector<8x1xf32> to vector<8x16xf32>
    %16 = arith.subf %12, %15 : vector<8x16xf32>
    %17 = math.exp %16 : vector<8x16xf32>
    %cst_12 = arith.constant dense<0.000000e+00> : vector<8xf32>
    %18 = vector.multi_reduction <add>, %17, %cst_12 [1] : vector<8x16xf32> to vector<8xf32>
    %19 = vector.shape_cast %18 : vector<8xf32> to vector<8x1xf32>
    %20 = tpu.reciprocal %19 {approx = true} : vector<8x1xf32> -> vector<8x1xf32>
    %21 = vector.broadcast %20 : vector<8x1xf32> to vector<8x16xf32>
    %22 = arith.mulf %17, %21 : vector<8x16xf32>
    %23 = tpu.concatenate %12, %22 in 1 : vector<8x16xf32>, vector<8x16xf32> -> vector<8x32xf32>
    %c0_13 = arith.constant 0 : index
    %c0_14 = arith.constant 0 : index
    %24 = vector.load %arg6[%c0_13, %c0_14] : memref<8x32xf32, #tpu.memory_space<vmem>>, vector<8x32xf32>
    tpu.vector_store %arg6[%c0_13, %c0_14], %23 {strides = array<i32>} : memref<8x32xf32, #tpu.memory_space<vmem>>, vector<8x32xf32>,
    return
  }
  func.func @transform_0(%arg0: i32) -> (i32, i32) {
    %c0_i32 = arith.constant 0 : i32
    %c0_i32_0 = arith.constant 0 : i32
    return %arg0, %c0_i32 : i32, i32
  }
  func.func @transform_1(%arg0: i32) -> (i32, i32) {
    %c0_i32 = arith.constant 0 : i32
    %c0_i32_0 = arith.constant 0 : i32
    %c0_i32_1 = arith.constant 0 : i32
    return %c0_i32, %c0_i32_0 : i32, i32
  }
  func.func @transform_2(%arg0: i32) -> (i32, i32) {
    %c0_i32 = arith.constant 0 : i32
    %c0_i32_0 = arith.constant 0 : i32
    %c0_i32_1 = arith.constant 0 : i32
    return %c0_i32, %c0_i32_0 : i32, i32
  }
  func.func @transform_3(%arg0: i32) -> (i32, i32) {
    %c0_i32 = arith.constant 0 : i32
    %c0_i32_0 = arith.constant 0 : i32
    %c0_i32_1 = arith.constant 0 : i32
    return %c0_i32, %c0_i32_0 : i32, i32
  }
  func.func @transform_4(%arg0: i32) -> (i32, i32) {
    %c0_i32 = arith.constant 0 : i32
    %c0_i32_0 = arith.constant 0 : i32
    %c0_i32_1 = arith.constant 0 : i32
    return %c0_i32, %c0_i32_0 : i32, i32
  }
  func.func @transform_5(%arg0: i32) -> (i32, i32) {
    %c0_i32 = arith.constant 0 : i32
    %c0_i32_0 = arith.constant 0 : i32
    return %arg0, %c0_i32 : i32, i32
  }
}

</mosaic_0001>

<llo_original>
// kernel: tpu_custom_call.1
$region0: #{tpu_custom_call.1}
  #allocation0 [shape = 'u32[]', space=smem, size = 0x4, offset = 0x4, fixed_abs, tag = 'smem constant byte address 0x4 - core index']
  #allocation1 [shape = 'u32[144,128]{1,0:T(1,128)}', space=vmem, size = 0x12000, scoped, tag = 'internal scratch']
  %s0 = inlined_call_operand.hbm [shape: f32[8,1536], index: 0, kind: input, shape index: {}]
  %s1 = inlined_call_operand.hbm [shape: f32[128,1536], index: 1, kind: input, shape index: {}]
  %s2 = inlined_call_operand.vmem [shape: f32[1,128], index: 2, kind: input, shape index: {}]
  %s3 = inlined_call_operand.hbm [shape: f32[16,128], index: 3, kind: input, shape index: {}]
  %s4 = inlined_call_operand.vmem [shape: f32[1,16], index: 4, kind: input, shape index: {}]
  %s5 = inlined_call_operand.hbm [shape: f32[8,32], index: 5, kind: output, shape index: {}]
  %s6 = sld [smem:[#allocation0]]
  $region42: #{tpu_custom_call.1} parent=0
    _
  %s8 = ssub.s32 1, %s6
  %s9 = scalar_select 0, %s8, %s6
  $region1: #{tpu_custom_call.1} parent=0
    #allocation2 [shape = 'u8[49152]{0}', space=vmem, size = 0xc000, scoped, tag = 'input window, operand 0, single buffered']
    #allocation3 [shape = 's32[1]{0}', space=sflag, size = 0x4, scoped, tag = 'scoped memory for tpu_custom_call.1']
    #allocation4 [shape = 's32[1]{0}', space=sflag, size = 0x4, scoped, tag = 'scoped memory for tpu_custom_call.1']
    #allocation5 [shape = 'u8[786432]{0}', space=vmem, size = 0xc0000, scoped, tag = 'input window, operand 1, single buffered']
    #allocation6 [shape = 's32[1]{0}', space=sflag, size = 0x4, scoped, tag = 'scoped memory for tpu_custom_call.1']
    #allocation7 [shape = 'u8[8192]{0}', space=vmem, size = 0x2000, scoped, tag = 'input window, operand 3, single buffered']
    #allocation8 [shape = 'u8[4096]{0}', space=vmem, size = 0x1000, scoped, tag = 'output window, operand 0, single buffered']
    %10 = vsyncpa [#allocation3], 0
    %11 = vsyncpa [#allocation6], 0
    %12 = vsyncpa [#allocation4], 0
    // Predicated region
    $region2: #{tpu_custom_call.1} parent=1 // pred_check
      _
    $region3: #{tpu_custom_call.1} parent=1 // pred_check_branch
      %14 = sbr.rel (0) target = $region5
    $region4: #{tpu_custom_call.1} parent=1 // pred_region
      %s16 = ssub.s32 1536, 1536
      %17 = vsyncadd [#allocation3], %s16
      %s19 = sshll.u32 [#allocation2], 4
      %s20 = int_to_ptr.vmem [resolvable:$true] %s19
      %22 = dma.hbm_to_vmem [thread:$0]  %s0, 1536, %s20, [#allocation3]
    $region5: #{tpu_custom_call.1} parent=1 // pred_fallthru
      _
    // Predicated region
    $region6: #{tpu_custom_call.1} parent=1 // pred_check
      _
    $region7: #{tpu_custom_call.1} parent=1 // pred_check_branch
      %24 = sbr.rel (0) target = $region9
    $region8: #{tpu_custom_call.1} parent=1 // pred_region
      %s26 = ssub.s32 24576, 24576
      %27 = vsyncadd [#allocation6], %s26
      %s28 = sshll.u32 [#allocation5], 4
      %s29 = int_to_ptr.vmem [resolvable:$true] %s28
      %34 = dma.hbm_to_vmem [thread:$0]  %s1, 24576, %s29, [#allocation6], 1536, 1536, 96
    $region9: #{tpu_custom_call.1} parent=1 // pred_fallthru
      _
    // Predicated region
    $region10: #{tpu_custom_call.1} parent=1 // pred_check
      _
    $region11: #{tpu_custom_call.1} parent=1 // pred_check_branch
      %36 = sbr.rel (0) target = $region13
    $region12: #{tpu_custom_call.1} parent=1 // pred_region
      _
    $region13: #{tpu_custom_call.1} parent=1 // pred_fallthru
      _
    // Predicated region
    $region14: #{tpu_custom_call.1} parent=1 // pred_check
      _
    $region15: #{tpu_custom_call.1} parent=1 // pred_check_branch
      %38 = sbr.rel (0) target = $region17
    $region16: #{tpu_custom_call.1} parent=1 // pred_region
      %s40 = ssub.s32 256, 256
      %41 = vsyncadd [#allocation6], %s40
      %s42 = sshll.u32 [#allocation7], 4
      %s43 = int_to_ptr.vmem [resolvable:$true] %s42
      %48 = dma.hbm_to_vmem [thread:$0]  %s3, 256, %s43, [#allocation6], 128, 128, 8
    $region17: #{tpu_custom_call.1} parent=1 // pred_fallthru
      _
    // Predicated region
    $region18: #{tpu_custom_call.1} parent=1 // pred_check
      _
    $region19: #{tpu_custom_call.1} parent=1 // pred_check_branch
      %50 = sbr.rel (0) target = $region21
    $region20: #{tpu_custom_call.1} parent=1 // pred_region
      _
    $region21: #{tpu_custom_call.1} parent=1 // pred_fallthru
      _
    // Predicated region
    $region22: #{tpu_custom_call.1} parent=1 // pred_check
      _
    $region23: #{tpu_custom_call.1} parent=1 // pred_check_branch
      %52 = sbr.rel (0) target = $region25
    $region24: #{tpu_custom_call.1} parent=1 // pred_region
      %53 = dma.done [#allocation3], 1536
    $region25: #{tpu_custom_call.1} parent=1 // pred_fallthru
      _
    // Predicated region
    $region26: #{tpu_custom_call.1} parent=1 // pred_check
      _
    $region27: #{tpu_custom_call.1} parent=1 // pred_check_branch
      %55 = sbr.rel (0) target = $region29
    $region28: #{tpu_custom_call.1} parent=1 // pred_region
      %56 = dma.done [#allocation6], 24576
    $region29: #{tpu_custom_call.1} parent=1 // pred_fallthru
      _
    // Predicated region
    $region30: #{tpu_custom_call.1} parent=1 // pred_check
      _
    $region31: #{tpu_custom_call.1} parent=1 // pred_check_branch
      %58 = sbr.rel (0) target = $region33
    $region32: #{tpu_custom_call.1} parent=1 // pred_region
      %59 = dma.done [#allocation6], 256
    $region33: #{tpu_custom_call.1} parent=1 // pred_fallthru
      _
    %v60 = vld [vmem:[#allocation2] sm:$0xff]
    %v61 = vld [vmem:[#allocation2 + $0x8] sm:$0xff]
    %v62 = vld [vmem:[#allocation2 + $0x10] sm:$0xff]
    %v63 = vld [vmem:[#allocation2 + $0x18] sm:$0xff]
    %v64 = vld [vmem:[#allocation2 + $0x20] sm:$0xff]
    %v65 = vld [vmem:[#allocation2 + $0x28] sm:$0xff]
    %v66 = vld [vmem:[#allocation2 + $0x30] sm:$0xff]
    %v67 = vld [vmem:[#allocation2 + $0x38] sm:$0xff]
    %v68 = vld [vmem:[#allocation2 + $0x40] sm:$0xff]
    %v69 = vld [vmem:[#allocation2 + $0x48] sm:$0xff]
    %v70 = vld [vmem:[#allocation2 + $0x50] sm:$0xff]
    %v71 = vld [vmem:[#allocation2 + $0x58] sm:$0xff]
    %v72 = vld [vmem:[#allocation5] sm:$0xff]
    %v73 = vld [vmem:[#allocation5 + $0x8] sm:$0xff]
    %v74 = vld [vmem:[#allocation5 + $0x10] sm:$0xff]
    %v75 = vld [vmem:[#allocation5 + $0x18] sm:$0xff]
    %v76 = vld [vmem:[#allocation5 + $0x20] sm:$0xff]
    %v77 = vld [vmem:[#allocation5 + $0x28] sm:$0xff]
    %v78 = vld [vmem:[#allocation5 + $0x30] sm:$0xff]
    %v79 = vld [vmem:[#allocation5 + $0x38] sm:$0xff]
    %v80 = vld [vmem:[#allocation5 + $0x40] sm:$0xff]
    %v81 = vld [vmem:[#allocation5 + $0x48] sm:$0xff]
    %v82 = vld [vmem:[#allocation5 + $0x50] sm:$0xff]
    %v83 = vld [vmem:[#allocation5 + $0x58] sm:$0xff]
    %v84 = vld [vmem:[#allocation5 + $0x60] sm:$0xff]
    %v85 = vld [vmem:[#allocation5 + $0x68] sm:$0xff]
    %v86 = vld [vmem:[#allocation5 + $0x70] sm:$0xff]
    %v87 = vld [vmem:[#allocation5 + $0x78] sm:$0xff]
    %v88 = vld [vmem:[#allocation5 + $0x80] sm:$0xff]
    %v89 = vld [vmem:[#allocation5 + $0x88] sm:$0xff]
    %v90 = vld [vmem:[#allocation5 + $0x90] sm:$0xff]
    %v91 = vld [vmem:[#allocation5 + $0x98] sm:$0xff]
    %v92 = vld [vmem:[#allocation5 + $0xa0] sm:$0xff]
    %v93 = vld [vmem:[#allocation5 + $0xa8] sm:$0xff]
    %v94 = vld [vmem:[#allocation5 + $0xb0] sm:$0xff]
    %v95 = vld [vmem:[#allocation5 + $0xb8] sm:$0xff]
    %v96 = vld [vmem:[#allocation5 + $0xc0] sm:$0xff]
    %v97 = vld [vmem:[#allocation5 + $0xc8] sm:$0xff]
    %v98 = vld [vmem:[#allocation5 + $0xd0] sm:$0xff]
    %v99 = vld [vmem:[#allocation5 + $0xd8] sm:$0xff]
    %v100 = vld [vmem:[#allocation5 + $0xe0] sm:$0xff]
    %v101 = vld [vmem:[#allocation5 + $0xe8] sm:$0xff]
    %v102 = vld [vmem:[#allocation5 + $0xf0] sm:$0xff]
    %v103 = vld [vmem:[#allocation5 + $0xf8] sm:$0xff]
    %v104 = vld [vmem:[#allocation5 + $0x100] sm:$0xff]
    %v105 = vld [vmem:[#allocation5 + $0x108] sm:$0xff]
    %v106 = vld [vmem:[#allocation5 + $0x110] sm:$0xff]
    %v107 = vld [vmem:[#allocation5 + $0x118] sm:$0xff]
    %v108 = vld [vmem:[#allocation5 + $0x120] sm:$0xff]
    %v109 = vld [vmem:[#allocation5 + $0x128] sm:$0xff]
    %v110 = vld [vmem:[#allocation5 + $0x130] sm:$0xff]
    %v111 = vld [vmem:[#allocation5 + $0x138] sm:$0xff]
    %v112 = vld [vmem:[#allocation5 + $0x140] sm:$0xff]
    %v113 = vld [vmem:[#allocation5 + $0x148] sm:$0xff]
    %v114 = vld [vmem:[#allocation5 + $0x150] sm:$0xff]
    %v115 = vld [vmem:[#allocation5 + $0x158] sm:$0xff]
    %v116 = vld [vmem:[#allocation5 + $0x160] sm:$0xff]
    %v117 = vld [vmem:[#allocation5 + $0x168] sm:$0xff]
    %v118 = vld [vmem:[#allocation5 + $0x170] sm:$0xff]
    %v119 = vld [vmem:[#allocation5 + $0x178] sm:$0xff]
    %v120 = vld [vmem:[#allocation5 + $0x180] sm:$0xff]
    %v121 = vld [vmem:[#allocation5 + $0x188] sm:$0xff]
    %v122 = vld [vmem:[#allocation5 + $0x190] sm:$0xff]
    %v123 = vld [vmem:[#allocation5 + $0x198] sm:$0xff]
    %v124 = vld [vmem:[#allocation5 + $0x1a0] sm:$0xff]
    %v125 = vld [vmem:[#allocation5 + $0x1a8] sm:$0xff]
    %v126 = vld [vmem:[#allocation5 + $0x1b0] sm:$0xff]
    %v127 = vld [vmem:[#allocation5 + $0x1b8] sm:$0xff]
    %v128 = vld [vmem:[#allocation5 + $0x1c0] sm:$0xff]
    %v129 = vld [vmem:[#allocation5 + $0x1c8] sm:$0xff]
    %v130 = vld [vmem:[#allocation5 + $0x1d0] sm:$0xff]
    %v131 = vld [vmem:[#allocation5 + $0x1d8] sm:$0xff]
    %v132 = vld [vmem:[#allocation5 + $0x1e0] sm:$0xff]
    %v133 = vld [vmem:[#allocation5 + $0x1e8] sm:$0xff]
    %v134 = vld [vmem:[#allocation5 + $0x1f0] sm:$0xff]
    %v135 = vld [vmem:[#allocation5 + $0x1f8] sm:$0xff]
    %v136 = vld [vmem:[#allocation5 + $0x200] sm:$0xff]
    %v137 = vld [vmem:[#allocation5 + $0x208] sm:$0xff]
    %v138 = vld [vmem:[#allocation5 + $0x210] sm:$0xff]
    %v139 = vld [vmem:[#allocation5 + $0x218] sm:$0xff]
    %v140 = vld [vmem:[#allocation5 + $0x220] sm:$0xff]
    %v141 = vld [vmem:[#allocation5 + $0x228] sm:$0xff]
    %v142 = vld [vmem:[#allocation5 + $0x230] sm:$0xff]
    %v143 = vld [vmem:[#allocation5 + $0x238] sm:$0xff]
    %v144 = vld [vmem:[#allocation5 + $0x240] sm:$0xff]
    %v145 = vld [vmem:[#allocation5 + $0x248] sm:$0xff]
    %v146 = vld [vmem:[#allocation5 + $0x250] sm:$0xff]
    %v147 = vld [vmem:[#allocation5 + $0x258] sm:$0xff]
    %v148 = vld [vmem:[#allocation5 + $0x260] sm:$0xff]
    %v149 = vld [vmem:[#allocation5 + $0x268] sm:$0xff]
    %v150 = vld [vmem:[#allocation5 + $0x270] sm:$0xff]
    %v151 = vld [vmem:[#allocation5 + $0x278] sm:$0xff]
    %v152 = vld [vmem:[#allocation5 + $0x280] sm:$0xff]
    %v153 = vld [vmem:[#allocation5 + $0x288] sm:$0xff]
    %v154 = vld [vmem:[#allocation5 + $0x290] sm:$0xff]
    %v155 = vld [vmem:[#allocation5 + $0x298] sm:$0xff]
    %v156 = vld [vmem:[#allocation5 + $0x2a0] sm:$0xff]
    %v157 = vld [vmem:[#allocation5 + $0x2a8] sm:$0xff]
    %v158 = vld [vmem:[#allocation5 + $0x2b0] sm:$0xff]
    %v159 = vld [vmem:[#allocation5 + $0x2b8] sm:$0xff]
    %v160 = vld [vmem:[#allocation5 + $0x2c0] sm:$0xff]
    %v161 = vld [vmem:[#allocation5 + $0x2c8] sm:$0xff]
    %v162 = vld [vmem:[#allocation5 + $0x2d0] sm:$0xff]
    %v163 = vld [vmem:[#allocation5 + $0x2d8] sm:$0xff]
    %v164 = vld [vmem:[#allocation5 + $0x2e0] sm:$0xff]
    %v165 = vld [vmem:[#allocation5 + $0x2e8] sm:$0xff]
    %v166 = vld [vmem:[#allocation5 + $0x2f0] sm:$0xff]
    %v167 = vld [vmem:[#allocation5 + $0x2f8] sm:$0xff]
    %v168 = vld [vmem:[#allocation5 + $0x300] sm:$0xff]
    %v169 = vld [vmem:[#allocation5 + $0x308] sm:$0xff]
    %v170 = vld [vmem:[#allocation5 + $0x310] sm:$0xff]
    %v171 = vld [vmem:[#allocation5 + $0x318] sm:$0xff]
    %v172 = vld [vmem:[#allocation5 + $0x320] sm:$0xff]
    %v173 = vld [vmem:[#allocation5 + $0x328] sm:$0xff]
    %v174 = vld [vmem:[#allocation5 + $0x330] sm:$0xff]
    %v175 = vld [vmem:[#allocation5 + $0x338] sm:$0xff]
    %v176 = vld [vmem:[#allocation5 + $0x340] sm:$0xff]
    %v177 = vld [vmem:[#allocation5 + $0x348] sm:$0xff]
    %v178 = vld [vmem:[#allocation5 + $0x350] sm:$0xff]
    %v179 = vld [vmem:[#allocation5 + $0x358] sm:$0xff]
    %v180 = vld [vmem:[#allocation5 + $0x360] sm:$0xff]
    %v181 = vld [vmem:[#allocation5 + $0x368] sm:$0xff]
    %v182 = vld [vmem:[#allocation5 + $0x370] sm:$0xff]
    %v183 = vld [vmem:[#allocation5 + $0x378] sm:$0xff]
    %v184 = vld [vmem:[#allocation5 + $0x380] sm:$0xff]
    %v185 = vld [vmem:[#allocation5 + $0x388] sm:$0xff]
    %v186 = vld [vmem:[#allocation5 + $0x390] sm:$0xff]
    %v187 = vld [vmem:[#allocation5 + $0x398] sm:$0xff]
    %v188 = vld [vmem:[#allocation5 + $0x3a0] sm:$0xff]
    %v189 = vld [vmem:[#allocation5 + $0x3a8] sm:$0xff]
    %v190 = vld [vmem:[#allocation5 + $0x3b0] sm:$0xff]
    %v191 = vld [vmem:[#allocation5 + $0x3b8] sm:$0xff]
    %v192 = vld [vmem:[#allocation5 + $0x3c0] sm:$0xff]
    %v193 = vld [vmem:[#allocation5 + $0x3c8] sm:$0xff]
    %v194 = vld [vmem:[#allocation5 + $0x3d0] sm:$0xff]
    %v195 = vld [vmem:[#allocation5 + $0x3d8] sm:$0xff]
    %v196 = vld [vmem:[#allocation5 + $0x3e0] sm:$0xff]
    %v197 = vld [vmem:[#allocation5 + $0x3e8] sm:$0xff]
    %v198 = vld [vmem:[#allocation5 + $0x3f0] sm:$0xff]
    %v199 = vld [vmem:[#allocation5 + $0x3f8] sm:$0xff]
    %v200 = vld [vmem:[#allocation5 + $0x400] sm:$0xff]
    %v201 = vld [vmem:[#allocation5 + $0x408] sm:$0xff]
    %v202 = vld [vmem:[#allocation5 + $0x410] sm:$0xff]
    %v203 = vld [vmem:[#allocation5 + $0x418] sm:$0xff]
    %v204 = vld [vmem:[#allocation5 + $0x420] sm:$0xff]
    %v205 = vld [vmem:[#allocation5 + $0x428] sm:$0xff]
    %v206 = vld [vmem:[#allocation5 + $0x430] sm:$0xff]
    %v207 = vld [vmem:[#allocation5 + $0x438] sm:$0xff]
    %v208 = vld [vmem:[#allocation5 + $0x440] sm:$0xff]
    %v209 = vld [vmem:[#allocation5 + $0x448] sm:$0xff]
    %v210 = vld [vmem:[#allocation5 + $0x450] sm:$0xff]
    %v211 = vld [vmem:[#allocation5 + $0x458] sm:$0xff]
    %v212 = vld [vmem:[#allocation5 + $0x460] sm:$0xff]
    %v213 = vld [vmem:[#allocation5 + $0x468] sm:$0xff]
    %v214 = vld [vmem:[#allocation5 + $0x470] sm:$0xff]
    %v215 = vld [vmem:[#allocation5 + $0x478] sm:$0xff]
    %v216 = vld [vmem:[#allocation5 + $0x480] sm:$0xff]
    %v217 = vld [vmem:[#allocation5 + $0x488] sm:$0xff]
    %v218 = vld [vmem:[#allocation5 + $0x490] sm:$0xff]
    %v219 = vld [vmem:[#allocation5 + $0x498] sm:$0xff]
    %v220 = vld [vmem:[#allocation5 + $0x4a0] sm:$0xff]
    %v221 = vld [vmem:[#allocation5 + $0x4a8] sm:$0xff]
    %v222 = vld [vmem:[#allocation5 + $0x4b0] sm:$0xff]
    %v223 = vld [vmem:[#allocation5 + $0x4b8] sm:$0xff]
    %v224 = vld [vmem:[#allocation5 + $0x4c0] sm:$0xff]
    %v225 = vld [vmem:[#allocation5 + $0x4c8] sm:$0xff]
    %v226 = vld [vmem:[#allocation5 + $0x4d0] sm:$0xff]
    %v227 = vld [vmem:[#allocation5 + $0x4d8] sm:$0xff]
    %v228 = vld [vmem:[#allocation5 + $0x4e0] sm:$0xff]
    %v229 = vld [vmem:[#allocation5 + $0x4e8] sm:$0xff]
    %v230 = vld [vmem:[#allocation5 + $0x4f0] sm:$0xff]
    %v231 = vld [vmem:[#allocation5 + $0x4f8] sm:$0xff]
    %v232 = vld [vmem:[#allocation5 + $0x500] sm:$0xff]
    %v233 = vld [vmem:[#allocation5 + $0x508] sm:$0xff]
    %v234 = vld [vmem:[#allocation5 + $0x510] sm:$0xff]
    %v235 = vld [vmem:[#allocation5 + $0x518] sm:$0xff]
    %v236 = vld [vmem:[#allocation5 + $0x520] sm:$0xff]
    %v237 = vld [vmem:[#allocation5 + $0x528] sm:$0xff]
    %v238 = vld [vmem:[#allocation5 + $0x530] sm:$0xff]
    %v239 = vld [vmem:[#allocation5 + $0x538] sm:$0xff]
    %v240 = vld [vmem:[#allocation5 + $0x540] sm:$0xff]
    %v241 = vld [vmem:[#allocation5 + $0x548] sm:$0xff]
    %v242 = vld [vmem:[#allocation5 + $0x550] sm:$0xff]
    %v243 = vld [vmem:[#allocation5 + $0x558] sm:$0xff]
    %v244 = vld [vmem:[#allocation5 + $0x560] sm:$0xff]
    %v245 = vld [vmem:[#allocation5 + $0x568] sm:$0xff]
    %v246 = vld [vmem:[#allocation5 + $0x570] sm:$0xff]
    %v247 = vld [vmem:[#allocation5 + $0x578] sm:$0xff]
    %v248 = vld [vmem:[#allocation5 + $0x580] sm:$0xff]
    %v249 = vld [vmem:[#allocation5 + $0x588] sm:$0xff]
    %v250 = vld [vmem:[#allocation5 + $0x590] sm:$0xff]
    %v251 = vld [vmem:[#allocation5 + $0x598] sm:$0xff]
    %v252 = vld [vmem:[#allocation5 + $0x5a0] sm:$0xff]
    %v253 = vld [vmem:[#allocation5 + $0x5a8] sm:$0xff]
    %v254 = vld [vmem:[#allocation5 + $0x5b0] sm:$0xff]
    %v255 = vld [vmem:[#allocation5 + $0x5b8] sm:$0xff]
    %v256 = vld [vmem:[#allocation5 + $0x5c0] sm:$0xff]
    %v257 = vld [vmem:[#allocation5 + $0x5c8] sm:$0xff]
    %v258 = vld [vmem:[#allocation5 + $0x5d0] sm:$0xff]
    %v259 = vld [vmem:[#allocation5 + $0x5d8] sm:$0xff]
    %v260 = vld [vmem:[#allocation5 + $0x5e0] sm:$0xff]
    %v261 = vld [vmem:[#allocation5 + $0x5e8] sm:$0xff]
    %v262 = vld [vmem:[#allocation5 + $0x5f0] sm:$0xff]
    %v263 = vld [vmem:[#allocation5 + $0x5f8] sm:$0xff]
    %v264 = vld [vmem:[%s2] sm:$0x1]
    %v266 = vlaneseq
    %v267 = vshrl.u32 %v266, 7
    %v268 = vsub.s32 0, %v267
    %v269 = vrot.slane %v264, %v268
    %271 = vmatprep.subr.mxu0 %v73
    %272 = vmatpush1.xpose.msra.mxu0 %v72
    %273 = vmatprep.subr.mxu0 %v85
    %274 = vmatpush1.xpose.msra.mxu0 %v84
    %275 = vmatprep.subr.mxu0 %v97
    %276 = vmatpush1.xpose.msra.mxu0 %v96
    %277 = vmatprep.subr.mxu0 %v109
    %278 = vmatpush1.xpose.msra.mxu0 %v108
    %279 = vmatprep.subr.mxu0 %v121
    %280 = vmatpush1.xpose.msra.mxu0 %v120
    %281 = vmatprep.subr.mxu0 %v133
    %282 = vmatpush1.xpose.msra.mxu0 %v132
    %283 = vmatprep.subr.mxu0 %v145
    %284 = vmatpush1.xpose.msra.mxu0 %v144
    %285 = vmatprep.subr.mxu0 %v157
    %286 = vmatpush1.xpose.msra.mxu0 %v156
    %287 = vmatprep.subr.mxu0 %v169
    %288 = vmatpush1.xpose.msra.mxu0 %v168
    %289 = vmatprep.subr.mxu0 %v181
    %290 = vmatpush1.xpose.msra.mxu0 %v180
    %291 = vmatprep.subr.mxu0 %v193
    %292 = vmatpush1.xpose.msra.mxu0 %v192
    %293 = vmatprep.subr.mxu0 %v205
    %294 = vmatpush1.xpose.msra.mxu0 %v204
    %295 = vmatprep.subr.mxu0 %v217
    %296 = vmatpush1.xpose.msra.mxu0 %v216
    %297 = vmatprep.subr.mxu0 %v229
    %298 = vmatpush1.xpose.msra.mxu0 %v228
    %299 = vmatprep.subr.mxu0 %v241
    %300 = vmatpush1.xpose.msra.mxu0 %v240
    %301 = vmatprep.subr.mxu0 %v253
    %302 = vmatpush1.xpose.msra.mxu0 %v252
    %303 = vmatprep.subr.mxu0 0.0
    %304 = vmatpush1.xpose.msra.mxu0 0.0
    %305 = vmatprep.subr.mxu0 0.0
    %306 = vmatpush1.xpose.msra.mxu0 0.0
    %307 = vmatprep.subr.mxu0 0.0
    %308 = vmatpush1.xpose.msra.mxu0 0.0
    %309 = vmatprep.subr.mxu0 0.0
    %310 = vmatpush1.xpose.msra.mxu0 0.0
    %311 = vmatprep.subr.mxu0 0.0
    %312 = vmatpush1.xpose.msra.mxu0 0.0
    %313 = vmatprep.subr.mxu0 0.0
    %314 = vmatpush1.xpose.msra.mxu0 0.0
    %315 = vmatprep.subr.mxu0 0.0
    %316 = vmatpush1.xpose.msra.mxu0 0.0
    %317 = vmatprep.subr.mxu0 0.0
    %318 = vmatpush1.xpose.msra.mxu0 0.0
    %319 = vmatprep.subr.mxu0 0.0
    %320 = vmatpush1.xpose.msra.mxu0 0.0
    %321 = vmatprep.subr.mxu0 0.0
    %322 = vmatpush1.xpose.msra.mxu0 0.0
    %323 = vmatprep.subr.mxu0 0.0
    %324 = vmatpush1.xpose.msra.mxu0 0.0
    %325 = vmatprep.subr.mxu0 0.0
    %326 = vmatpush1.xpose.msra.mxu0 0.0
    %327 = vmatprep.subr.mxu0 0.0
    %328 = vmatpush1.xpose.msra.mxu0 0.0
    %329 = vmatprep.subr.mxu0 0.0
    %330 = vmatpush1.xpose.msra.mxu0 0.0
    %331 = vmatprep.subr.mxu0 0.0
    %332 = vmatpush1.xpose.msra.mxu0 0.0
    %333 = vmatprep.subr.mxu0 0.0
    %334 = vmatpush1.xpose.msra.mxu0 0.0
    %335 = vmatprep.mubr.f32.mxu0 %v61
    %336 = vmatmul.mubr.f32.gmra.mrb[0].mxu0 %v60
    %v337 = vpop.f32.mrb[0].mxu0
    %v338 = vadd.f32 %v269, %v337
    %v339 = vpop.f32.mrb[0].mxu0
    %340 = vdwg.mxu0
    %341 = vmatprep.subr.mxu0 %v75
    %342 = vmatpush1.xpose.msra.mxu0 %v74
    %343 = vmatprep.subr.mxu0 %v87
    %344 = vmatpush1.xpose.msra.mxu0 %v86
    %345 = vmatprep.subr.mxu0 %v99
    %346 = vmatpush1.xpose.msra.mxu0 %v98
    %347 = vmatprep.subr.mxu0 %v111
    %348 = vmatpush1.xpose.msra.mxu0 %v110
    %349 = vmatprep.subr.mxu0 %v123
    %350 = vmatpush1.xpose.msra.mxu0 %v122
    %351 = vmatprep.subr.mxu0 %v135
    %352 = vmatpush1.xpose.msra.mxu0 %v134
    %353 = vmatprep.subr.mxu0 %v147
    %354 = vmatpush1.xpose.msra.mxu0 %v146
    %355 = vmatprep.subr.mxu0 %v159
    %356 = vmatpush1.xpose.msra.mxu0 %v158
    %357 = vmatprep.subr.mxu0 %v171
    %358 = vmatpush1.xpose.msra.mxu0 %v170
    %359 = vmatprep.subr.mxu0 %v183
    %360 = vmatpush1.xpose.msra.mxu0 %v182
    %361 = vmatprep.subr.mxu0 %v195
    %362 = vmatpush1.xpose.msra.mxu0 %v194
    %363 = vmatprep.subr.mxu0 %v207
    %364 = vmatpush1.xpose.msra.mxu0 %v206
    %365 = vmatprep.subr.mxu0 %v219
    %366 = vmatpush1.xpose.msra.mxu0 %v218
    %367 = vmatprep.subr.mxu0 %v231
    %368 = vmatpush1.xpose.msra.mxu0 %v230
    %369 = vmatprep.subr.mxu0 %v243
    %370 = vmatpush1.xpose.msra.mxu0 %v242
    %371 = vmatprep.subr.mxu0 %v255
    %372 = vmatpush1.xpose.msra.mxu0 %v254
    %373 = vmatprep.subr.mxu0 0.0
    %374 = vmatpush1.xpose.msra.mxu0 0.0
    %375 = vmatprep.subr.mxu0 0.0
    %376 = vmatpush1.xpose.msra.mxu0 0.0
    %377 = vmatprep.subr.mxu0 0.0
    %378 = vmatpush1.xpose.msra.mxu0 0.0
    %379 = vmatprep.subr.mxu0 0.0
    %380 = vmatpush1.xpose.msra.mxu0 0.0
    %381 = vmatprep.subr.mxu0 0.0
    %382 = vmatpush1.xpose.msra.mxu0 0.0
    %383 = vmatprep.subr.mxu0 0.0
    %384 = vmatpush1.xpose.msra.mxu0 0.0
    %385 = vmatprep.subr.mxu0 0.0
    %386 = vmatpush1.xpose.msra.mxu0 0.0
    %387 = vmatprep.subr.mxu0 0.0
    %388 = vmatpush1.xpose.msra.mxu0 0.0
    %389 = vmatprep.subr.mxu0 0.0
    %390 = vmatpush1.xpose.msra.mxu0 0.0
    %391 = vmatprep.subr.mxu0 0.0
    %392 = vmatpush1.xpose.msra.mxu0 0.0
    %393 = vmatprep.subr.mxu0 0.0
    %394 = vmatpush1.xpose.msra.mxu0 0.0
    %395 = vmatprep.subr.mxu0 0.0
    %396 = vmatpush1.xpose.msra.mxu0 0.0
    %397 = vmatprep.subr.mxu0 0.0
    %398 = vmatpush1.xpose.msra.mxu0 0.0
    %399 = vmatprep.subr.mxu0 0.0
    %400 = vmatpush1.xpose.msra.mxu0 0.0
    %401 = vmatprep.subr.mxu0 0.0
    %402 = vmatpush1.xpose.msra.mxu0 0.0
    %403 = vmatprep.subr.mxu0 0.0
    %404 = vmatpush1.xpose.msra.mxu0 0.0
    %405 = vmatprep.mubr.f32.mxu0 %v63
    %406 = vmatmul.mubr.f32.gmra.mrb[0].mxu0 %v62
    %v407 = vpop.f32.mrb[0].mxu0
    %v408 = vadd.f32 %v338, %v407
    %v409 = vpop.f32.mrb[0].mxu0
    %410 = vdwg.mxu0
    %411 = vmatprep.subr.mxu0 %v77
    %412 = vmatpush1.xpose.msra.mxu0 %v76
    %413 = vmatprep.subr.mxu0 %v89
    %414 = vmatpush1.xpose.msra.mxu0 %v88
    %415 = vmatprep.subr.mxu0 %v101
    %416 = vmatpush1.xpose.msra.mxu0 %v100
    %417 = vmatprep.subr.mxu0 %v113
    %418 = vmatpush1.xpose.msra.mxu0 %v112
    %419 = vmatprep.subr.mxu0 %v125
    %420 = vmatpush1.xpose.msra.mxu0 %v124
    %421 = vmatprep.subr.mxu0 %v137
    %422 = vmatpush1.xpose.msra.mxu0 %v136
    %423 = vmatprep.subr.mxu0 %v149
    %424 = vmatpush1.xpose.msra.mxu0 %v148
    %425 = vmatprep.subr.mxu0 %v161
    %426 = vmatpush1.xpose.msra.mxu0 %v160
    %427 = vmatprep.subr.mxu0 %v173
    %428 = vmatpush1.xpose.msra.mxu0 %v172
    %429 = vmatprep.subr.mxu0 %v185
    %430 = vmatpush1.xpose.msra.mxu0 %v184
    %431 = vmatprep.subr.mxu0 %v197
    %432 = vmatpush1.xpose.msra.mxu0 %v196
    %433 = vmatprep.subr.mxu0 %v209
    %434 = vmatpush1.xpose.msra.mxu0 %v208
    %435 = vmatprep.subr.mxu0 %v221
    %436 = vmatpush1.xpose.msra.mxu0 %v220
    %437 = vmatprep.subr.mxu0 %v233
    %438 = vmatpush1.xpose.msra.mxu0 %v232
    %439 = vmatprep.subr.mxu0 %v245
    %440 = vmatpush1.xpose.msra.mxu0 %v244
    %441 = vmatprep.subr.mxu0 %v257
    %442 = vmatpush1.xpose.msra.mxu0 %v256
    %443 = vmatprep.subr.mxu0 0.0
    %444 = vmatpush1.xpose.msra.mxu0 0.0
    %445 = vmatprep.subr.mxu0 0.0
    %446 = vmatpush1.xpose.msra.mxu0 0.0
    %447 = vmatprep.subr.mxu0 0.0
    %448 = vmatpush1.xpose.msra.mxu0 0.0
    %449 = vmatprep.subr.mxu0 0.0
    %450 = vmatpush1.xpose.msra.mxu0 0.0
    %451 = vmatprep.subr.mxu0 0.0
    %452 = vmatpush1.xpose.msra.mxu0 0.0
    %453 = vmatprep.subr.mxu0 0.0
    %454 = vmatpush1.xpose.msra.mxu0 0.0
    %455 = vmatprep.subr.mxu0 0.0
    %456 = vmatpush1.xpose.msra.mxu0 0.0
    %457 = vmatprep.subr.mxu0 0.0
    %458 = vmatpush1.xpose.msra.mxu0 0.0
    %459 = vmatprep.subr.mxu0 0.0
    %460 = vmatpush1.xpose.msra.mxu0 0.0
    %461 = vmatprep.subr.mxu0 0.0
    %462 = vmatpush1.xpose.msra.mxu0 0.0
    %463 = vmatprep.subr.mxu0 0.0
    %464 = vmatpush1.xpose.msra.mxu0 0.0
    %465 = vmatprep.subr.mxu0 0.0
    %466 = vmatpush1.xpose.msra.mxu0 0.0
    %467 = vmatprep.subr.mxu0 0.0
    %468 = vmatpush1.xpose.msra.mxu0 0.0
    %469 = vmatprep.subr.mxu0 0.0
    %470 = vmatpush1.xpose.msra.mxu0 0.0
    %471 = vmatprep.subr.mxu0 0.0
    %472 = vmatpush1.xpose.msra.mxu0 0.0
    %473 = vmatprep.subr.mxu0 0.0
    %474 = vmatpush1.xpose.msra.mxu0 0.0
    %475 = vmatprep.mubr.f32.mxu0 %v65
    %476 = vmatmul.mubr.f32.gmra.mrb[0].mxu0 %v64
    %v477 = vpop.f32.mrb[0].mxu0
    %v478 = vadd.f32 %v408, %v477
    %v479 = vpop.f32.mrb[0].mxu0
    %480 = vdwg.mxu0
    %481 = vmatprep.subr.mxu0 %v79
    %482 = vmatpush1.xpose.msra.mxu0 %v78
    %483 = vmatprep.subr.mxu0 %v91
    %484 = vmatpush1.xpose.msra.mxu0 %v90
    %485 = vmatprep.subr.mxu0 %v103
    %486 = vmatpush1.xpose.msra.mxu0 %v102
    %487 = vmatprep.subr.mxu0 %v115
    %488 = vmatpush1.xpose.msra.mxu0 %v114
    %489 = vmatprep.subr.mxu0 %v127
    %490 = vmatpush1.xpose.msra.mxu0 %v126
    %491 = vmatprep.subr.mxu0 %v139
    %492 = vmatpush1.xpose.msra.mxu0 %v138
    %493 = vmatprep.subr.mxu0 %v151
    %494 = vmatpush1.xpose.msra.mxu0 %v150
    %495 = vmatprep.subr.mxu0 %v163
    %496 = vmatpush1.xpose.msra.mxu0 %v162
    %497 = vmatprep.subr.mxu0 %v175
    %498 = vmatpush1.xpose.msra.mxu0 %v174
    %499 = vmatprep.subr.mxu0 %v187
    %500 = vmatpush1.xpose.msra.mxu0 %v186
    %501 = vmatprep.subr.mxu0 %v199
    %502 = vmatpush1.xpose.msra.mxu0 %v198
    %503 = vmatprep.subr.mxu0 %v211
    %504 = vmatpush1.xpose.msra.mxu0 %v210
    %505 = vmatprep.subr.mxu0 %v223
    %506 = vmatpush1.xpose.msra.mxu0 %v222
    %507 = vmatprep.subr.mxu0 %v235
    %508 = vmatpush1.xpose.msra.mxu0 %v234
    %509 = vmatprep.subr.mxu0 %v247
    %510 = vmatpush1.xpose.msra.mxu0 %v246
    %511 = vmatprep.subr.mxu0 %v259
    %512 = vmatpush1.xpose.msra.mxu0 %v258
    %513 = vmatprep.subr.mxu0 0.0
    %514 = vmatpush1.xpose.msra.mxu0 0.0
    %515 = vmatprep.subr.mxu0 0.0
    %516 = vmatpush1.xpose.msra.mxu0 0.0
    %517 = vmatprep.subr.mxu0 0.0
    %518 = vmatpush1.xpose.msra.mxu0 0.0
    %519 = vmatprep.subr.mxu0 0.0
    %520 = vmatpush1.xpose.msra.mxu0 0.0
    %521 = vmatprep.subr.mxu0 0.0
    %522 = vmatpush1.xpose.msra.mxu0 0.0
    %523 = vmatprep.subr.mxu0 0.0
    %524 = vmatpush1.xpose.msra.mxu0 0.0
    %525 = vmatprep.subr.mxu0 0.0
    %526 = vmatpush1.xpose.msra.mxu0 0.0
    %527 = vmatprep.subr.mxu0 0.0
    %528 = vmatpush1.xpose.msra.mxu0 0.0
    %529 = vmatprep.subr.mxu0 0.0
    %530 = vmatpush1.xpose.msra.mxu0 0.0
    %531 = vmatprep.subr.mxu0 0.0
    %532 = vmatpush1.xpose.msra.mxu0 0.0
    %533 = vmatprep.subr.mxu0 0.0
    %534 = vmatpush1.xpose.msra.mxu0 0.0
    %535 = vmatprep.subr.mxu0 0.0
    %536 = vmatpush1.xpose.msra.mxu0 0.0
    %537 = vmatprep.subr.mxu0 0.0
    %538 = vmatpush1.xpose.msra.mxu0 0.0
    %539 = vmatprep.subr.mxu0 0.0
    %540 = vmatpush1.xpose.msra.mxu0 0.0
    %541 = vmatprep.subr.mxu0 0.0
    %542 = vmatpush1.xpose.msra.mxu0 0.0
    %543 = vmatprep.subr.mxu0 0.0
    %544 = vmatpush1.xpose.msra.mxu0 0.0
    %545 = vmatprep.mubr.f32.mxu0 %v67
    %546 = vmatmul.mubr.f32.gmra.mrb[0].mxu0 %v66
    %v547 = vpop.f32.mrb[0].mxu0
    %v548 = vadd.f32 %v478, %v547
    %v549 = vpop.f32.mrb[0].mxu0
    %550 = vdwg.mxu0
    %551 = vmatprep.subr.mxu0 %v81
    %552 = vmatpush1.xpose.msra.mxu0 %v80
    %553 = vmatprep.subr.mxu0 %v93
    %554 = vmatpush1.xpose.msra.mxu0 %v92
    %555 = vmatprep.subr.mxu0 %v105
    %556 = vmatpush1.xpose.msra.mxu0 %v104
    %557 = vmatprep.subr.mxu0 %v117
    %558 = vmatpush1.xpose.msra.mxu0 %v116
    %559 = vmatprep.subr.mxu0 %v129
    %560 = vmatpush1.xpose.msra.mxu0 %v128
    %561 = vmatprep.subr.mxu0 %v141
    %562 = vmatpush1.xpose.msra.mxu0 %v140
    %563 = vmatprep.subr.mxu0 %v153
    %564 = vmatpush1.xpose.msra.mxu0 %v152
    %565 = vmatprep.subr.mxu0 %v165
    %566 = vmatpush1.xpose.msra.mxu0 %v164
    %567 = vmatprep.subr.mxu0 %v177
    %568 = vmatpush1.xpose.msra.mxu0 %v176
    %569 = vmatprep.subr.mxu0 %v189
    %570 = vmatpush1.xpose.msra.mxu0 %v188
    %571 = vmatprep.subr.mxu0 %v201
    %572 = vmatpush1.xpose.msra.mxu0 %v200
    %573 = vmatprep.subr.mxu0 %v213
    %574 = vmatpush1.xpose.msra.mxu0 %v212
    %575 = vmatprep.subr.mxu0 %v225
    %576 = vmatpush1.xpose.msra.mxu0 %v224
    %577 = vmatprep.subr.mxu0 %v237
    %578 = vmatpush1.xpose.msra.mxu0 %v236
    %579 = vmatprep.subr.mxu0 %v249
    %580 = vmatpush1.xpose.msra.mxu0 %v248
    %581 = vmatprep.subr.mxu0 %v261
    %582 = vmatpush1.xpose.msra.mxu0 %v260
    %583 = vmatprep.subr.mxu0 0.0
    %584 = vmatpush1.xpose.msra.mxu0 0.0
    %585 = vmatprep.subr.mxu0 0.0
    %586 = vmatpush1.xpose.msra.mxu0 0.0
    %587 = vmatprep.subr.mxu0 0.0
    %588 = vmatpush1.xpose.msra.mxu0 0.0
    %589 = vmatprep.subr.mxu0 0.0
    %590 = vmatpush1.xpose.msra.mxu0 0.0
    %591 = vmatprep.subr.mxu0 0.0
    %592 = vmatpush1.xpose.msra.mxu0 0.0
    %593 = vmatprep.subr.mxu0 0.0
    %594 = vmatpush1.xpose.msra.mxu0 0.0
    %595 = vmatprep.subr.mxu0 0.0
    %596 = vmatpush1.xpose.msra.mxu0 0.0
    %597 = vmatprep.subr.mxu0 0.0
    %598 = vmatpush1.xpose.msra.mxu0 0.0
    %599 = vmatprep.subr.mxu0 0.0
    %600 = vmatpush1.xpose.msra.mxu0 0.0
    %601 = vmatprep.subr.mxu0 0.0
    %602 = vmatpush1.xpose.msra.mxu0 0.0
    %603 = vmatprep.subr.mxu0 0.0
    %604 = vmatpush1.xpose.msra.mxu0 0.0
    %605 = vmatprep.subr.mxu0 0.0
    %606 = vmatpush1.xpose.msra.mxu0 0.0
    %607 = vmatprep.subr.mxu0 0.0
    %608 = vmatpush1.xpose.msra.mxu0 0.0
    %609 = vmatprep.subr.mxu0 0.0
    %610 = vmatpush1.xpose.msra.mxu0 0.0
    %611 = vmatprep.subr.mxu0 0.0
    %612 = vmatpush1.xpose.msra.mxu0 0.0
    %613 = vmatprep.subr.mxu0 0.0
    %614 = vmatpush1.xpose.msra.mxu0 0.0
    %615 = vmatprep.mubr.f32.mxu0 %v69
    %616 = vmatmul.mubr.f32.gmra.mrb[0].mxu0 %v68
    %v617 = vpop.f32.mrb[0].mxu0
    %v618 = vadd.f32 %v548, %v617
    %v619 = vpop.f32.mrb[0].mxu0
    %620 = vdwg.mxu0
    %621 = vmatprep.subr.mxu0 %v83
    %622 = vmatpush1.xpose.msra.mxu0 %v82
    %623 = vmatprep.subr.mxu0 %v95
    %624 = vmatpush1.xpose.msra.mxu0 %v94
    %625 = vmatprep.subr.mxu0 %v107
    %626 = vmatpush1.xpose.msra.mxu0 %v106
    %627 = vmatprep.subr.mxu0 %v119
    %628 = vmatpush1.xpose.msra.mxu0 %v118
    %629 = vmatprep.subr.mxu0 %v131
    %630 = vmatpush1.xpose.msra.mxu0 %v130
    %631 = vmatprep.subr.mxu0 %v143
    %632 = vmatpush1.xpose.msra.mxu0 %v142
    %633 = vmatprep.subr.mxu0 %v155
    %634 = vmatpush1.xpose.msra.mxu0 %v154
    %635 = vmatprep.subr.mxu0 %v167
    %636 = vmatpush1.xpose.msra.mxu0 %v166
    %637 = vmatprep.subr.mxu0 %v179
    %638 = vmatpush1.xpose.msra.mxu0 %v178
    %639 = vmatprep.subr.mxu0 %v191
    %640 = vmatpush1.xpose.msra.mxu0 %v190
    %641 = vmatprep.subr.mxu0 %v203
    %642 = vmatpush1.xpose.msra.mxu0 %v202
    %643 = vmatprep.subr.mxu0 %v215
    %644 = vmatpush1.xpose.msra.mxu0 %v214
    %645 = vmatprep.subr.mxu0 %v227
    %646 = vmatpush1.xpose.msra.mxu0 %v226
    %647 = vmatprep.subr.mxu0 %v239
    %648 = vmatpush1.xpose.msra.mxu0 %v238
    %649 = vmatprep.subr.mxu0 %v251
    %650 = vmatpush1.xpose.msra.mxu0 %v250
    %651 = vmatprep.subr.mxu0 %v263
    %652 = vmatpush1.xpose.msra.mxu0 %v262
    %653 = vmatprep.subr.mxu0 0.0
    %654 = vmatpush1.xpose.msra.mxu0 0.0
    %655 = vmatprep.subr.mxu0 0.0
    %656 = vmatpush1.xpose.msra.mxu0 0.0
    %657 = vmatprep.subr.mxu0 0.0
    %658 = vmatpush1.xpose.msra.mxu0 0.0
    %659 = vmatprep.subr.mxu0 0.0
    %660 = vmatpush1.xpose.msra.mxu0 0.0
    %661 = vmatprep.subr.mxu0 0.0
    %662 = vmatpush1.xpose.msra.mxu0 0.0
    %663 = vmatprep.subr.mxu0 0.0
    %664 = vmatpush1.xpose.msra.mxu0 0.0
    %665 = vmatprep.subr.mxu0 0.0
    %666 = vmatpush1.xpose.msra.mxu0 0.0
    %667 = vmatprep.subr.mxu0 0.0
    %668 = vmatpush1.xpose.msra.mxu0 0.0
    %669 = vmatprep.subr.mxu0 0.0
    %670 = vmatpush1.xpose.msra.mxu0 0.0
    %671 = vmatprep.subr.mxu0 0.0
    %672 = vmatpush1.xpose.msra.mxu0 0.0
    %673 = vmatprep.subr.mxu0 0.0
    %674 = vmatpush1.xpose.msra.mxu0 0.0
    %675 = vmatprep.subr.mxu0 0.0
    %676 = vmatpush1.xpose.msra.mxu0 0.0
    %677 = vmatprep.subr.mxu0 0.0
    %678 = vmatpush1.xpose.msra.mxu0 0.0
    %679 = vmatprep.subr.mxu0 0.0
    %680 = vmatpush1.xpose.msra.mxu0 0.0
    %681 = vmatprep.subr.mxu0 0.0
    %682 = vmatpush1.xpose.msra.mxu0 0.0
    %683 = vmatprep.subr.mxu0 0.0
    %684 = vmatpush1.xpose.msra.mxu0 0.0
    %685 = vmatprep.mubr.f32.mxu0 %v71
    %686 = vmatmul.mubr.f32.gmra.mrb[0].mxu0 %v70
    %v687 = vpop.f32.mrb[0].mxu0
    %v688 = vadd.f32 %v618, %v687
    %v689 = vpop.f32.mrb[0].mxu0
    %690 = vdwg.mxu0
    %v691 = vmax.f32 %v688, 0.0
    %v692 = vld [vmem:[#allocation7] sm:$0xff]
    %v693 = vld [vmem:[#allocation7 + $0x8] sm:$0xff]
    %v694 = vld [vmem:[%s4] sm:$0x1]
    %v696 = vlaneseq
    %v697 = vshrl.u32 %v696, 7
    %v698 = vsub.s32 0, %v697
    %v699 = vrot.slane %v694, %v698
    %701 = vmatprep.subr.mxu0 0.0
    %702 = vmatpush1.xpose.msra.mxu0 %v692
    %703 = vmatprep.subr.mxu0 0.0
    %704 = vmatpush1.xpose.msra.mxu0 %v693
    %705 = vmatprep.subr.mxu0 0.0
    %706 = vmatpush1.xpose.msra.mxu0 0.0
    %707 = vmatprep.subr.mxu0 0.0
    %708 = vmatpush1.xpose.msra.mxu0 0.0
    %709 = vmatprep.subr.mxu0 0.0
    %710 = vmatpush1.xpose.msra.mxu0 0.0
    %711 = vmatprep.subr.mxu0 0.0
    %712 = vmatpush1.xpose.msra.mxu0 0.0
    %713 = vmatprep.subr.mxu0 0.0
    %714 = vmatpush1.xpose.msra.mxu0 0.0
    %715 = vmatprep.subr.mxu0 0.0
    %716 = vmatpush1.xpose.msra.mxu0 0.0
    %717 = vmatprep.subr.mxu0 0.0
    %718 = vmatpush1.xpose.msra.mxu0 0.0
    %719 = vmatprep.subr.mxu0 0.0
    %720 = vmatpush1.xpose.msra.mxu0 0.0
    %721 = vmatprep.subr.mxu0 0.0
    %722 = vmatpush1.xpose.msra.mxu0 0.0
    %723 = vmatprep.subr.mxu0 0.0
    %724 = vmatpush1.xpose.msra.mxu0 0.0
    %725 = vmatprep.subr.mxu0 0.0
    %726 = vmatpush1.xpose.msra.mxu0 0.0
    %727 = vmatprep.subr.mxu0 0.0
    %728 = vmatpush1.xpose.msra.mxu0 0.0
    %729 = vmatprep.subr.mxu0 0.0
    %730 = vmatpush1.xpose.msra.mxu0 0.0
    %731 = vmatprep.subr.mxu0 0.0
    %732 = vmatpush1.xpose.msra.mxu0 0.0
    %733 = vmatprep.subr.mxu0 0.0
    %734 = vmatpush1.xpose.msra.mxu0 0.0
    %735 = vmatprep.subr.mxu0 0.0
    %736 = vmatpush1.xpose.msra.mxu0 0.0
    %737 = vmatprep.subr.mxu0 0.0
    %738 = vmatpush1.xpose.msra.mxu0 0.0
    %739 = vmatprep.subr.mxu0 0.0
    %740 = vmatpush1.xpose.msra.mxu0 0.0
    %741 = vmatprep.subr.mxu0 0.0
    %742 = vmatpush1.xpose.msra.mxu0 0.0
    %743 = vmatprep.subr.mxu0 0.0
    %744 = vmatpush1.xpose.msra.mxu0 0.0
    %745 = vmatprep.subr.mxu0 0.0
    %746 = vmatpush1.xpose.msra.mxu0 0.0
    %747 = vmatprep.subr.mxu0 0.0
    %748 = vmatpush1.xpose.msra.mxu0 0.0
    %749 = vmatprep.subr.mxu0 0.0
    %750 = vmatpush1.xpose.msra.mxu0 0.0
    %751 = vmatprep.subr.mxu0 0.0
    %752 = vmatpush1.xpose.msra.mxu0 0.0
    %753 = vmatprep.subr.mxu0 0.0
    %754 = vmatpush1.xpose.msra.mxu0 0.0
    %755 = vmatprep.subr.mxu0 0.0
    %756 = vmatpush1.xpose.msra.mxu0 0.0
    %757 = vmatprep.subr.mxu0 0.0
    %758 = vmatpush1.xpose.msra.mxu0 0.0
    %759 = vmatprep.subr.mxu0 0.0
    %760 = vmatpush1.xpose.msra.mxu0 0.0
    %761 = vmatprep.subr.mxu0 0.0
    %762 = vmatpush1.xpose.msra.mxu0 0.0
    %763 = vmatprep.subr.mxu0 0.0
    %764 = vmatpush1.xpose.msra.mxu0 0.0
    %765 = vmatprep.mubr.f32.mxu0 0.0
    %766 = vmatmul.mubr.f32.gmra.mrb[0].mxu0 %v691
    %v767 = vpop.f32.mrb[0].mxu0
    %v768 = vadd.f32 %v699, %v767
    %v769 = vpop.f32.mrb[0].mxu0
    %770 = vdwg.mxu0
    %vm771 = vcmask 130048
    %v772 = vsel %vm771, %v768, -inf
    %773 = vmax.xlane.f32.xlu0 %v772
    %v774 = vpop.xlane.xlu0 %773
    %v775 = vsub.f32 %v768, %v774
    %v776 = vmul.f32 %v775, 1.442695
    %v777 = vpow.pop %v776
    %v778 = vsel %vm771, %v777, 0.0
    %779 = vadd.xlane.f32.xlu0 %v778
    %v780 = vpop.xlane.xlu0 %779
    %v781 = vrcp.pop %v780
    %v782 = vmul.f32 %v777, %v781
    %784 = vrot.lane.b32.xlu0 %v782, 16
    %v785 = vpop.permute.xlu0 %784
    %v787 = vsel %vm771, %v768, %v785
    %vm788 = vcmask 261120
    %789 = vst.msk [vmem:[#allocation8] sm:$0xff] %vm788, %v787
    // Predicated region
    $region34: #{tpu_custom_call.1} parent=1 // pred_check
      _
    $region35: #{tpu_custom_call.1} parent=1 // pred_check_branch
      %791 = sbr.rel (0) target = $region37
    $region36: #{tpu_custom_call.1} parent=1 // pred_region
      %s793 = ssub.s32 128, 128
      %794 = vsyncadd [#allocation4], %s793
      %s796 = sshll.u32 [#allocation8], 4
      %s797 = int_to_ptr.vmem [resolvable:$true] %s796
      %799 = dma.vmem_to_hbm [thread:$0]  %s797, 128, %s5, [#allocation4]
    $region37: #{tpu_custom_call.1} parent=1 // pred_fallthru
      _
    // Predicated region
    $region38: #{tpu_custom_call.1} parent=1 // pred_check
      _
    $region39: #{tpu_custom_call.1} parent=1 // pred_check_branch
      %801 = sbr.rel (0) target = $region41
    $region40: #{tpu_custom_call.1} parent=1 // pred_region
      %802 = dma.done [#allocation4], 128
    $region41: #{tpu_custom_call.1} parent=1 // pred_fallthru
      _
    %803 = vsyncpa [#allocation3], 1
    %804 = vsyncpa [#allocation6], 1
    %805 = vsyncpa [#allocation4], 1

</llo_original>
